<compile_context>
chip_gen: v7x
topology: tpu7x:2x2x1
jax: 0.10.0
libtpu: 0.0.40
codegen_flags: <defaults>
</compile_context>

<pallas_src>
import functools

import jax
import jax.numpy as jnp
from jax import lax
from jax.experimental import pallas as pl
from jax.experimental.pallas import tpu as pltpu

_LANE = 128


def _round_up(x: int, m: int) -> int:
    return ((x + m - 1) // m) * m


def _num_tensorcores() -> int:
    """Best-effort TensorCore count: v7x has 2 per chip, v5e/v6e have 1."""
    try:
        kind = (jax.devices()[0].device_kind or "").lower()
    except Exception:
        return 1
    if "v7" in kind or "7x" in kind:
        return 2
    return 1


def _rmse_kernel(y_ref, t_ref, acc_ref, *, tile_rows, n_rows,
                 blocks_per_split, row_blocks, need_mask):
    c = pl.program_id(0)   # TensorCore split  ("parallel")
    i = pl.program_id(1)   # row-tile index    ("arbitrary", reduction axis)

    @pl.when(i == 0)
    def _():
        acc_ref[...] = jnp.zeros_like(acc_ref)

    def _accumulate(masked):
        d = y_ref[...].astype(jnp.float32) - t_ref[...].astype(jnp.float32)
        if masked:
            # Zero rows past the real array (partial last tile and/or the
            # clamped duplicate block of an uneven split).  Select, not
            # multiply, so stale NaN/Inf in the padded VMEM region cannot
            # propagate.
            row0 = (c * blocks_per_split + i) * tile_rows
            rid = lax.broadcasted_iota(jnp.int32, d.shape, 0) + row0
            d = jnp.where(rid < n_rows, d, jnp.float32(0.0))
        d2 = d * d
        # Fold sublane groups into the resident (8, 128) accumulator: pure
        # vreg adds on the VPU, no per-step cross-lane (XLU) reduce.
        acc_ref[...] += jnp.sum(d2.reshape(tile_rows // 8, 8, _LANE), axis=0)

    if need_mask:
        # Only the boundary block needs the iota/compare/select; clamped
        # duplicate blocks of an uneven split also satisfy blk >= row_blocks-1
        # (their index_map was clamped) and get fully zeroed by the mask.
        blk = c * blocks_per_split + i
        is_edge = blk >= row_blocks - 1

        @pl.when(is_edge)
        def _():
            _accumulate(True)

        @pl.when(jnp.logical_not(is_edge))
        def _():
            _accumulate(False)
    else:
        _accumulate(False)


def rmse_loss(y: jax.Array, t: jax.Array, *,
              tile_rows_max: int | None = None,
              n_splits: int | None = None) -> jax.Array:
    """sqrt(mean((y - t)^2)) over all elements, computed in a Pallas kernel."""
    assert y.shape == t.shape, (y.shape, t.shape)
    n_total = y.size
    itemsize = jnp.dtype(y.dtype).itemsize

    flat_y = y.reshape(-1)
    flat_t = t.reshape(-1)

    rows = n_total // _LANE
    n_main = rows * _LANE

    # Tiny inputs (< one 128-lane row): not worth a kernel launch.
    if rows == 0:
        d = flat_y.astype(jnp.float32) - flat_t.astype(jnp.float32)
        return jnp.sqrt(jnp.sum(d * d) / n_total)

    # Rare non-128-divisible tail (<128 elements): handled with a tiny jnp
    # expression instead of zero-padding both operands through HBM.
    if n_main != n_total:
        td = (flat_y[n_main:].astype(jnp.float32)
              - flat_t[n_main:].astype(jnp.float32))
        tail_sq = jnp.sum(td * td)
        flat_y = flat_y[:n_main]
        flat_t = flat_t[:n_main]
    else:
        tail_sq = None

    y2d = flat_y.reshape(rows, _LANE)   # free bitcast when already divisible
    t2d = flat_t.reshape(rows, _LANE)

    # ---- Tile sizing: HBM-bandwidth bound, so use big, dtype-scaled tiles
    # (~4 MiB per input per step) to amortize the ~0.35 us per-step overhead.
    sublane = {4: 8, 2: 16, 1: 32}.get(itemsize, 8)
    if tile_rows_max is None:
        target_tile_bytes = 4 << 20
        tile_rows_max = max(target_tile_bytes // (_LANE * itemsize), sublane)
    tile_rows = min(_round_up(tile_rows_max, sublane), _round_up(rows, sublane))
    row_blocks = pl.cdiv(rows, tile_rows)

    # ---- 2-way TensorCore split only when a second core exists (v7x).  On
    # single-TC v5e/v6e it would just add a clamped duplicate block and
    # per-step masking with no upside.
    if n_splits is None:
        n_splits = 2 if (_num_tensorcores() >= 2 and row_blocks >= 2) else 1
    n_splits = max(1, min(int(n_splits), row_blocks))
    blocks_per_split = pl.cdiv(row_blocks, n_splits)
    grid = (n_splits, blocks_per_split)
    need_mask = (n_splits * blocks_per_split * tile_rows) != rows

    def in_map(c, i):
        blk = c * blocks_per_split + i
        # Clamp so a DMA never starts fully out of bounds; the in-kernel edge
        # mask zeroes the contribution of any clamped duplicate block.
        return (jnp.minimum(blk, row_blocks - 1), 0)

    kernel = functools.partial(
        _rmse_kernel,
        tile_rows=tile_rows,
        n_rows=rows,
        blocks_per_split=blocks_per_split,
        row_blocks=row_blocks,
        need_mask=need_mask,
    )

    # VMEM need: 2 inputs x 2 pipeline buffers x tile bytes (+ slack for the
    # tiny output block / internal scratch).  Raising the scoped limit covers
    # v5e's 16 MiB default; the resulting ~24 MiB stays well inside every
    # generation's ceiling (v7x physical VMEM is 64 MiB).
    vmem_needed = 4 * tile_rows * _LANE * itemsize + (4 << 20)
    compiler_params = pltpu.CompilerParams(
        # "parallel" shards the split axis across TensorCores on megacore
        # chips (v7x); elsewhere it's a plain (size-1 here) serial loop.
        dimension_semantics=("parallel", "arbitrary"),
        vmem_limit_bytes=int(max(vmem_needed, 24 << 20)),
    )

    partials = pl.pallas_call(
        kernel,
        out_shape=jax.ShapeDtypeStruct((n_splits, 8, _LANE), jnp.float32),
        grid_spec=pltpu.PrefetchScalarGridSpec(
            num_scalar_prefetch=0,
            grid=grid,
            in_specs=[
                pl.BlockSpec((tile_rows, _LANE), in_map),
                pl.BlockSpec((tile_rows, _LANE), in_map),
            ],
            # Leading dim squeezed: each split accumulates into its own
            # resident (8, 128) output block across the reduction axis.
            out_specs=pl.BlockSpec((None, 8, _LANE), lambda c, i: (c, 0, 0)),
        ),
        compiler_params=compiler_params,
    )(y2d, t2d)

    total = jnp.sum(partials)
    if tail_sq is not None:
        total = total + tail_sq
    # Note: n_total is converted to f32 for the divide; above 2^24 elements
    # that rounds the count by ~1e-7 relative — negligible for a loss value.
    return jnp.sqrt(total / n_total)


if __name__ == "__main__":
    key = jax.random.PRNGKey(0)

    # Primary check: small NCHW-like tensors, default (large-tile) config.
    ky, kt = jax.random.split(key)
    y = jax.random.normal(ky, (2, 4, 16, 16), dtype=jnp.float32)
    t = jax.random.normal(kt, (2, 4, 16, 16), dtype=jnp.float32)
    loss = jax.block_until_ready(rmse_loss(y, t))
    ref = jnp.sqrt(jnp.mean((y - t) ** 2))
    assert jnp.allclose(loss, ref, rtol=1e-5, atol=1e-6), (loss, ref)

    # Non-128-divisible element count -> jnp tail path + partial last tile.
    k2y, k2t = jax.random.split(jax.random.PRNGKey(1))
    y2 = jax.random.normal(k2y, (3, 5, 7, 11), dtype=jnp.float32)
    t2 = jax.random.normal(k2t, (3, 5, 7, 11), dtype=jnp.float32)
    loss2 = jax.block_until_ready(rmse_loss(y2, t2, tile_rows_max=8))
    ref2 = jnp.sqrt(jnp.mean((y2 - t2) ** 2))
    assert jnp.allclose(loss2, ref2, rtol=1e-5, atol=1e-6), (loss2, ref2)

    # Forced 2-way split with odd block count -> clamped duplicate block +
    # edge-gated mask (exercised on any chip generation).
    k3y, k3t = jax.random.split(jax.random.PRNGKey(2))
    y3 = jax.random.normal(k3y, (2, 9, 16, 8), dtype=jnp.float32)
    t3 = jax.random.normal(k3t, (2, 9, 16, 8), dtype=jnp.float32)
    loss3 = jax.block_until_ready(rmse_loss(y3, t3, tile_rows_max=8, n_splits=2))
    ref3 = jnp.sqrt(jnp.mean((y3 - t3) ** 2))
    assert jnp.allclose(loss3, ref3, rtol=1e-5, atol=1e-6), (loss3, ref3)

    # bf16 inputs: kernel upcasts to f32; reference computed in f32.
    k4y, k4t = jax.random.split(jax.random.PRNGKey(3))
    y4 = jax.random.normal(k4y, (2, 4, 16, 16), dtype=jnp.float32).astype(jnp.bfloat16)
    t4 = jax.random.normal(k4t, (2, 4, 16, 16), dtype=jnp.float32).astype(jnp.bfloat16)
    loss4 = jax.block_until_ready(rmse_loss(y4, t4))
    ref4 = jnp.sqrt(jnp.mean((y4.astype(jnp.float32) - t4.astype(jnp.float32)) ** 2))
    assert jnp.allclose(loss4, ref4, rtol=1e-5, atol=1e-6), (loss4, ref4)

    print("KERNEL_OK")
</pallas_src>

<mosaic_0001>
module attributes {stable_mosaic.version = 11 : i64} {
  func.func @_rmse_kernel(%arg0: i32, %arg1: i32, %arg2: memref<16x128xf32, #tpu.memory_space<vmem>>, %arg3: memref<16x128xf32, #tpu.memory_space<vmem>>, %arg4: memref<1x8x128xf32, #tpu.memory_space<vmem>>) attributes {dimension_semantics = [#tpu.dimension_semantics<parallel>, #tpu.dimension_semantics<arbitrary>], iteration_bounds = array<i64: 1, 1>, scalar_prefetch = 0 : i64, scratch_operands = 0 : i64, tpu.core_type = #tpu.core_type<tc>, window_params = [{transform_indices = @transform_0, window_bounds = array<i64: 16, 128>}, {transform_indices = @transform_1, window_bounds = array<i64: 16, 128>}, {transform_indices = @transform_2, window_bounds = array<i64: 1, 8, 128>}]} {
    %c0_i32 = arith.constant 0 : i32
    %0 = arith.cmpi eq, %arg1, %c0_i32 : i32
    %1 = arith.extui %0 : i1 to i32
    %c0_i32_0 = arith.constant 0 : i32
    %2 = arith.cmpi ne, %1, %c0_i32_0 : i32
    scf.if %2 {
      %cst_10 = arith.constant 0.000000e+00 : f32
      %15 = vector.broadcast %cst_10 : f32 to vector<8x128xf32>
      %c0_11 = arith.constant 0 : index
      %c0_12 = arith.constant 0 : index
      %c0_13 = arith.constant 0 : index
      %16 = vector.load %arg4[%c0_11, %c0_12, %c0_13] : memref<1x8x128xf32, #tpu.memory_space<vmem>>, vector<1x8x128xf32>
      %17 = vector.shape_cast %16 : vector<1x8x128xf32> to vector<8x128xf32>
      %18 = vector.shape_cast %15 : vector<8x128xf32> to vector<1x8x128xf32>
      tpu.vector_store %arg4[%c0_11, %c0_12, %c0_13], %18 {strides = array<i32>} : memref<1x8x128xf32, #tpu.memory_space<vmem>>, vector<1x8x128xf32>,
    } else {
    }
    %c0 = arith.constant 0 : index
    %c0_1 = arith.constant 0 : index
    %3 = vector.load %arg2[%c0, %c0_1] : memref<16x128xf32, #tpu.memory_space<vmem>>, vector<16x128xf32>
    %c0_2 = arith.constant 0 : index
    %c0_3 = arith.constant 0 : index
    %4 = vector.load %arg3[%c0_2, %c0_3] : memref<16x128xf32, #tpu.memory_space<vmem>>, vector<16x128xf32>
    %5 = arith.subf %3, %4 : vector<16x128xf32>
    %6 = arith.mulf %5, %5 : vector<16x128xf32>
    %c0_4 = arith.constant 0 : index
    %c0_5 = arith.constant 0 : index
    %c0_6 = arith.constant 0 : index
    %7 = vector.load %arg4[%c0_4, %c0_5, %c0_6] : memref<1x8x128xf32, #tpu.memory_space<vmem>>, vector<1x8x128xf32>
    %8 = vector.shape_cast %7 : vector<1x8x128xf32> to vector<8x128xf32>
    %9 = vector.shape_cast %6 : vector<16x128xf32> to vector<2x8x128xf32>
    %cst = arith.constant dense<0.000000e+00> : vector<8x128xf32>
    %10 = vector.multi_reduction <add>, %9, %cst [0] : vector<2x8x128xf32> to vector<8x128xf32>
    %11 = arith.addf %8, %10 : vector<8x128xf32>
    %c0_7 = arith.constant 0 : index
    %c0_8 = arith.constant 0 : index
    %c0_9 = arith.constant 0 : index
    %12 = vector.load %arg4[%c0_7, %c0_8, %c0_9] : memref<1x8x128xf32, #tpu.memory_space<vmem>>, vector<1x8x128xf32>
    %13 = vector.shape_cast %12 : vector<1x8x128xf32> to vector<8x128xf32>
    %14 = vector.shape_cast %11 : vector<8x128xf32> to vector<1x8x128xf32>
    tpu.vector_store %arg4[%c0_7, %c0_8, %c0_9], %14 {strides = array<i32>} : memref<1x8x128xf32, #tpu.memory_space<vmem>>, vector<1x8x128xf32>,
    return
  }
  func.func @transform_0(%arg0: i32, %arg1: i32) -> (i32, i32) {
    %c1_i32 = arith.constant 1 : i32
    %0 = arith.muli %arg0, %c1_i32 : i32
    %1 = arith.addi %0, %arg1 : i32
    %c0_i32 = arith.constant 0 : i32
    %2 = arith.minsi %1, %c0_i32 : i32
    %c0_i32_0 = arith.constant 0 : i32
    %c0_i32_1 = arith.constant 0 : i32
    return %2, %c0_i32_0 : i32, i32
  }
  func.func @transform_1(%arg0: i32, %arg1: i32) -> (i32, i32) {
    %c1_i32 = arith.constant 1 : i32
    %0 = arith.muli %arg0, %c1_i32 : i32
    %1 = arith.addi %0, %arg1 : i32
    %c0_i32 = arith.constant 0 : i32
    %2 = arith.minsi %1, %c0_i32 : i32
    %c0_i32_0 = arith.constant 0 : i32
    %c0_i32_1 = arith.constant 0 : i32
    return %2, %c0_i32_0 : i32, i32
  }
  func.func @transform_2(%arg0: i32, %arg1: i32) -> (i32, i32, i32) {
    %c0_i32 = arith.constant 0 : i32
    %c0_i32_0 = arith.constant 0 : i32
    %c0_i32_1 = arith.constant 0 : i32
    return %arg0, %c0_i32, %c0_i32_0 : i32, i32, i32
  }
}

</mosaic_0001>

<llo_original>
// kernel: tpu_custom_call.1
$region0: #{tpu_custom_call.1}
  #allocation0 [shape = 'u32[]', space=smem, size = 0x4, offset = 0x4, fixed_abs, tag = 'smem constant byte address 0x4 - core index']
  #allocation1 [shape = 'u32[144,128]{1,0:T(1,128)}', space=vmem, size = 0x12000, scoped, tag = 'internal scratch']
  %s0 = inlined_call_operand.hbm [shape: f32[16,128], index: 0, kind: input, shape index: {}]
  %s1 = inlined_call_operand.hbm [shape: f32[16,128], index: 1, kind: input, shape index: {}]
  %s2 = inlined_call_operand.hbm [shape: f32[1,8,128], index: 2, kind: output, shape index: {}]
  %s3 = sld [smem:[#allocation0]]
  $region30: #{tpu_custom_call.1} parent=0
    _
  %s5 = ssub.s32 1, %s3
  %s6 = scalar_select 0, %s5, %s3
  $region1: #{tpu_custom_call.1} parent=0
    #allocation2 [shape = 'u8[8192]{0}', space=vmem, size = 0x2000, scoped, tag = 'input window, operand 0, single buffered']
    #allocation3 [shape = 's32[1]{0}', space=sflag, size = 0x4, scoped, tag = 'scoped memory for tpu_custom_call.1']
    #allocation4 [shape = 's32[1]{0}', space=sflag, size = 0x4, scoped, tag = 'scoped memory for tpu_custom_call.1']
    #allocation5 [shape = 'u8[8192]{0}', space=vmem, size = 0x2000, scoped, tag = 'input window, operand 1, single buffered']
    #allocation6 [shape = 's32[1]{0}', space=sflag, size = 0x4, scoped, tag = 'scoped memory for tpu_custom_call.1']
    #allocation7 [shape = 'u8[4096]{0}', space=vmem, size = 0x1000, scoped, tag = 'output window, operand 0, single buffered']
    %7 = vsyncpa [#allocation3], 0
    %8 = vsyncpa [#allocation6], 0
    %9 = vsyncpa [#allocation4], 0
    // Predicated region
    $region2: #{tpu_custom_call.1} parent=1 // pred_check
      _
    $region3: #{tpu_custom_call.1} parent=1 // pred_check_branch
      %11 = sbr.rel (0) target = $region5
    $region4: #{tpu_custom_call.1} parent=1 // pred_region
      %s12 = sadd.s32 0, 0
      %p13 = scmp.lt.s32.totalorder %s12, 0
      %s14 = scalar_select %p13, %s12, 0
      %s15 = smul.u32 2, %s14
      %s17 = ssub.s32 256, 256
      %18 = vsyncadd [#allocation3], %s17
      %s19 = smul.addr %s15, 128
      %s20 = scalar_lea.hbm %s0, %s19
      %s21 = sshll.u32 [#allocation2], 4
      %s22 = int_to_ptr.vmem [resolvable:$true] %s21
      %27 = dma.hbm_to_vmem [thread:$0]  %s20, 256, %s22, [#allocation3], 128, 128, 8
    $region5: #{tpu_custom_call.1} parent=1 // pred_fallthru
      _
    // Predicated region
    $region6: #{tpu_custom_call.1} parent=1 // pred_check
      _
    $region7: #{tpu_custom_call.1} parent=1 // pred_check_branch
      %29 = sbr.rel (0) target = $region9
    $region8: #{tpu_custom_call.1} parent=1 // pred_region
      %s30 = sadd.s32 0, 0
      %p31 = scmp.lt.s32.totalorder %s30, 0
      %s32 = scalar_select %p31, %s30, 0
      %s33 = smul.u32 2, %s32
      %s35 = ssub.s32 256, 256
      %36 = vsyncadd [#allocation6], %s35
      %s37 = smul.addr %s33, 128
      %s38 = scalar_lea.hbm %s1, %s37
      %s39 = sshll.u32 [#allocation5], 4
      %s40 = int_to_ptr.vmem [resolvable:$true] %s39
      %45 = dma.hbm_to_vmem [thread:$0]  %s38, 256, %s40, [#allocation6], 128, 128, 8
    $region9: #{tpu_custom_call.1} parent=1 // pred_fallthru
      _
    // Predicated region
    $region10: #{tpu_custom_call.1} parent=1 // pred_check
      _
    $region11: #{tpu_custom_call.1} parent=1 // pred_check_branch
      %47 = sbr.rel (0) target = $region13
    $region12: #{tpu_custom_call.1} parent=1 // pred_region
      %48 = dma.done [#allocation3], 256
    $region13: #{tpu_custom_call.1} parent=1 // pred_fallthru
      _
    // Predicated region
    $region14: #{tpu_custom_call.1} parent=1 // pred_check
      _
    $region15: #{tpu_custom_call.1} parent=1 // pred_check_branch
      %50 = sbr.rel (0) target = $region17
    $region16: #{tpu_custom_call.1} parent=1 // pred_region
      %51 = dma.done [#allocation6], 256
    $region17: #{tpu_custom_call.1} parent=1 // pred_fallthru
      _
    %s52 = sadd.s32 0, 0
    %p53 = scmp.lt.s32.totalorder %s52, 0
    %s54 = scalar_select %p53, %s52, 0
    %s55 = smul.u32 2, %s54
    %s56 = sadd.s32 0, 0
    %p57 = scmp.lt.s32.totalorder %s56, 0
    %s58 = scalar_select %p57, %s56, 0
    %s59 = smul.u32 2, %s58
    %p60 = scmp.eq.s32.totalorder 0, 0
    // Predicated region
    $region18: #{tpu_custom_call.1} parent=1 // pred_check
      %p61 = pneg %p60
    $region19: #{tpu_custom_call.1} parent=1 // pred_check_branch
      %63 = sbr.rel (%p61) target = $region21
    $region20: #{tpu_custom_call.1} parent=1 // pred_region
      %64 = vst [vmem:[#allocation7] sm:$0xff] 0.0
    $region21: #{tpu_custom_call.1} parent=1 // pred_fallthru
      _
    %v65 = vld [vmem:[#allocation2] sm:$0xff]
    %v66 = vld [vmem:[#allocation2 + $0x8] sm:$0xff]
    %v67 = vld [vmem:[#allocation5] sm:$0xff]
    %v68 = vld [vmem:[#allocation5 + $0x8] sm:$0xff]
    %v69 = vsub.f32 %v65, %v67
    %v70 = vsub.f32 %v66, %v68
    %v71 = vmul.f32 %v69, %v69
    %v72 = vmul.f32 %v70, %v70
    %v73 = vld [vmem:[#allocation7] sm:$0xff]
    %v74 = vadd.f32 %v71, %v72
    %v75 = vadd.f32 %v73, %v74
    %76 = vst [vmem:[#allocation7] sm:$0xff] %v75
    // Predicated region
    $region22: #{tpu_custom_call.1} parent=1 // pred_check
      _
    $region23: #{tpu_custom_call.1} parent=1 // pred_check_branch
      %78 = sbr.rel (0) target = $region25
    $region24: #{tpu_custom_call.1} parent=1 // pred_region
      %s80 = ssub.s32 128, 128
      %81 = vsyncadd [#allocation4], %s80
      %s83 = sshll.u32 [#allocation7], 4
      %s84 = int_to_ptr.vmem [resolvable:$true] %s83
      %86 = dma.vmem_to_hbm [thread:$0]  %s84, 128, %s2, [#allocation4]
    $region25: #{tpu_custom_call.1} parent=1 // pred_fallthru
      _
    // Predicated region
    $region26: #{tpu_custom_call.1} parent=1 // pred_check
      _
    $region27: #{tpu_custom_call.1} parent=1 // pred_check_branch
      %88 = sbr.rel (0) target = $region29
    $region28: #{tpu_custom_call.1} parent=1 // pred_region
      %89 = dma.done [#allocation4], 128
    $region29: #{tpu_custom_call.1} parent=1 // pred_fallthru
      _
    %90 = vsyncpa [#allocation3], 1
    %91 = vsyncpa [#allocation6], 1
    %92 = vsyncpa [#allocation4], 1

</llo_original>
